<compile_context>
chip_gen: v7x
topology: tpu7x:2x2x1
jax: 0.10.0
libtpu: 0.0.40
codegen_flags: <defaults>
</compile_context>

<pallas_src>
import jax
import jax.numpy as jnp
from jax import lax
from jax.experimental import pallas as pl
from jax.experimental.pallas import tpu as pltpu


def _vmem_budget():
    """Per-input-block VMEM budget and scoped-VMEM limit, generation aware."""
    phys = 64 * 1024 * 1024  # conservative default = v7x physical VMEM
    try:
        info = pltpu.get_tpu_info()
        phys = int(getattr(info, "vmem_capacity_bytes", phys))
    except Exception:
        pass
    # Two double-buffered input blocks must stay well under physical VMEM.
    block_budget = min(12 * 1024 * 1024, phys // 8)   # 12 MiB (v5e/v6e), 8 MiB (v7x)
    vmem_limit = min(phys * 3 // 4, 96 * 1024 * 1024)  # 96 MiB (v5e/v6e), 48 MiB (v7x)
    return block_budget, int(vmem_limit)


def _choose_tiles(D, H, W, itemsize, block_budget):
    """Pick (TH, TW) satisfying the (8,128)-or-full-dim block constraint."""
    # Width: full rows whenever an 8-row, full-width, all-D block fits the
    # budget (one contiguous DMA run per disparity plane). Otherwise a
    # multiple of 128 (lane-dense, unmasked stores); edge tiles are masked.
    if W <= 128 or D * 8 * W * itemsize <= block_budget:
        TW = W
    else:
        tw = (block_budget // (D * 8 * itemsize)) // 128 * 128
        TW = int(max(128, min(tw, (W // 128) * 128)))
    # Height: multiple of 8 (or full dim if H < 8), sized to the budget and
    # capped at 64 so the f32 accumulator stays small.
    if H < 8:
        TH = H
    else:
        th = (block_budget // max(1, D * TW * itemsize)) // 8 * 8
        h_cap = ((H + 7) // 8) * 8
        TH = int(max(8, min(th, h_cap, 64)))
    return TH, TW


def _make_disp_reg_kernel(D: int, unroll: int):
    def kernel(x_ref, o_ref):
        # x_ref: (1, D, TH, TW)  one batch element, one spatial tile
        # o_ref: (1, TH, TW)     expected disparity for that tile
        acc0 = jnp.zeros(o_ref.shape, jnp.float32)

        def mac(d, acc):
            # Per-slice MAC with a scalar weight: keeps the live set to one
            # (TH, TW) accumulator; bf16 inputs are converted per slice.
            w = d.astype(jnp.float32)
            return acc + x_ref[:, d, :, :].astype(jnp.float32) * w

        acc = lax.fori_loop(0, D, mac, acc0, unroll=unroll)
        o_ref[...] = acc.astype(o_ref.dtype)

    return kernel


def disparity_regression(x: jax.Array, maxdisp: int) -> jax.Array:
    """x: (B, D, H, W) probabilities over disparity (f32 or bf16), D == maxdisp.
    Returns (B, H, W) float32 expected disparity (f32 accumulation)."""
    B, D, H, W = x.shape
    assert D == maxdisp, "channel dim must equal maxdisp"

    itemsize = jnp.dtype(x.dtype).itemsize
    block_budget, vmem_limit = _vmem_budget()
    TH, TW = _choose_tiles(D, H, W, itemsize, block_budget)

    nh = pl.cdiv(H, TH)
    nw = pl.cdiv(W, TW)
    # Largest spatial axis leads (megacore split on v7x); W tiles innermost so
    # consecutive grid steps touch contiguous HBM.
    grid = (nh, B, nw)

    kernel = _make_disp_reg_kernel(D, unroll=(D if D <= 16 else 8))

    grid_spec = pltpu.PrefetchScalarGridSpec(
        num_scalar_prefetch=0,
        grid=grid,
        in_specs=[
            pl.BlockSpec((1, D, TH, TW), lambda hi, b, wi: (b, 0, hi, wi)),
        ],
        out_specs=pl.BlockSpec((1, TH, TW), lambda hi, b, wi: (b, hi, wi)),
    )

    cost = pl.CostEstimate(
        flops=2 * B * D * H * W,
        bytes_accessed=B * D * H * W * itemsize + B * H * W * 4,
        transcendentals=0,
    )

    return pl.pallas_call(
        kernel,
        out_shape=jax.ShapeDtypeStruct((B, H, W), jnp.float32),
        grid_spec=grid_spec,
        compiler_params=pltpu.CompilerParams(
            dimension_semantics=("parallel", "parallel", "parallel"),
            vmem_limit_bytes=vmem_limit,
        ),
        cost_estimate=cost,
    )(x)


if __name__ == "__main__":
    key = jax.random.PRNGKey(0)
    B, D, H, W = 2, 4, 16, 16          # maxdisp = 4 (small demo shapes)

    # Synthetic softmax-like probabilities over the disparity axis (as in PSMnet).
    logits = jax.random.normal(key, (B, D, H, W), dtype=jnp.float32)
    x = jax.nn.softmax(logits, axis=1)

    out = disparity_regression(x, maxdisp=D)
    out = jax.block_until_ready(out)

    # Reference check against a plain-JAX reproduction of the PyTorch forward.
    disp = jnp.arange(D, dtype=jnp.float32).reshape(1, D, 1, 1)
    ref = jnp.sum(x * disp, axis=1)
    assert out.shape == (B, H, W)
    assert jnp.allclose(out, ref, atol=1e-5, rtol=1e-5)

    print("KERNEL_OK")
</pallas_src>

<mosaic_0001>
module attributes {stable_mosaic.version = 11 : i64} {
  func.func @kernel(%arg0: i32, %arg1: i32, %arg2: i32, %arg3: memref<1x4x16x16xf32, #tpu.memory_space<vmem>>, %arg4: memref<1x16x16xf32, #tpu.memory_space<vmem>>) attributes {dimension_semantics = [#tpu.dimension_semantics<parallel>, #tpu.dimension_semantics<parallel>, #tpu.dimension_semantics<parallel>], iteration_bounds = array<i64: 1, 2, 1>, scalar_prefetch = 0 : i64, scratch_operands = 0 : i64, tpu.core_type = #tpu.core_type<tc>, window_params = [{transform_indices = @transform_0, window_bounds = array<i64: 1, 4, 16, 16>}, {transform_indices = @transform_1, window_bounds = array<i64: 1, 16, 16>}]} {
    %cst = arith.constant 0.000000e+00 : f32
    %0 = vector.broadcast %cst : f32 to vector<1x16x16xf32>
    %c0_i32 = arith.constant 0 : i32
    %1 = arith.sitofp %c0_i32 : i32 to f32
    %c0 = arith.constant 0 : index
    %2 = arith.index_cast %c0_i32 : i32 to index
    %c0_0 = arith.constant 0 : index
    %c0_1 = arith.constant 0 : index
    %3 = vector.load %arg3[%c0, %2, %c0_0, %c0_1] : memref<1x4x16x16xf32, #tpu.memory_space<vmem>>, vector<1x1x16x16xf32>
    %4 = vector.shape_cast %3 : vector<1x1x16x16xf32> to vector<1x16x16xf32>
    %5 = vector.broadcast %1 : f32 to vector<1x16x16xf32>
    %6 = arith.mulf %4, %5 : vector<1x16x16xf32>
    %7 = arith.addf %0, %6 : vector<1x16x16xf32>
    %c1_i32 = arith.constant 1 : i32
    %8 = arith.sitofp %c1_i32 : i32 to f32
    %c0_2 = arith.constant 0 : index
    %9 = arith.index_cast %c1_i32 : i32 to index
    %c0_3 = arith.constant 0 : index
    %c0_4 = arith.constant 0 : index
    %10 = vector.load %arg3[%c0_2, %9, %c0_3, %c0_4] : memref<1x4x16x16xf32, #tpu.memory_space<vmem>>, vector<1x1x16x16xf32>
    %11 = vector.shape_cast %10 : vector<1x1x16x16xf32> to vector<1x16x16xf32>
    %12 = vector.broadcast %8 : f32 to vector<1x16x16xf32>
    %13 = arith.mulf %11, %12 : vector<1x16x16xf32>
    %14 = arith.addf %7, %13 : vector<1x16x16xf32>
    %c2_i32 = arith.constant 2 : i32
    %15 = arith.sitofp %c2_i32 : i32 to f32
    %c0_5 = arith.constant 0 : index
    %16 = arith.index_cast %c2_i32 : i32 to index
    %c0_6 = arith.constant 0 : index
    %c0_7 = arith.constant 0 : index
    %17 = vector.load %arg3[%c0_5, %16, %c0_6, %c0_7] : memref<1x4x16x16xf32, #tpu.memory_space<vmem>>, vector<1x1x16x16xf32>
    %18 = vector.shape_cast %17 : vector<1x1x16x16xf32> to vector<1x16x16xf32>
    %19 = vector.broadcast %15 : f32 to vector<1x16x16xf32>
    %20 = arith.mulf %18, %19 : vector<1x16x16xf32>
    %21 = arith.addf %14, %20 : vector<1x16x16xf32>
    %c3_i32 = arith.constant 3 : i32
    %22 = arith.sitofp %c3_i32 : i32 to f32
    %c0_8 = arith.constant 0 : index
    %23 = arith.index_cast %c3_i32 : i32 to index
    %c0_9 = arith.constant 0 : index
    %c0_10 = arith.constant 0 : index
    %24 = vector.load %arg3[%c0_8, %23, %c0_9, %c0_10] : memref<1x4x16x16xf32, #tpu.memory_space<vmem>>, vector<1x1x16x16xf32>
    %25 = vector.shape_cast %24 : vector<1x1x16x16xf32> to vector<1x16x16xf32>
    %26 = vector.broadcast %22 : f32 to vector<1x16x16xf32>
    %27 = arith.mulf %25, %26 : vector<1x16x16xf32>
    %28 = arith.addf %21, %27 : vector<1x16x16xf32>
    %c4_i32 = arith.constant 4 : i32
    %c0_11 = arith.constant 0 : index
    %c0_12 = arith.constant 0 : index
    %c0_13 = arith.constant 0 : index
    %29 = vector.load %arg4[%c0_11, %c0_12, %c0_13] : memref<1x16x16xf32, #tpu.memory_space<vmem>>, vector<1x16x16xf32>
    tpu.vector_store %arg4[%c0_11, %c0_12, %c0_13], %28 {strides = array<i32>} : memref<1x16x16xf32, #tpu.memory_space<vmem>>, vector<1x16x16xf32>,
    return
  }
  func.func @transform_0(%arg0: i32, %arg1: i32, %arg2: i32) -> (i32, i32, i32, i32) {
    %c0_i32 = arith.constant 0 : i32
    %c0_i32_0 = arith.constant 0 : i32
    return %arg1, %c0_i32, %arg0, %arg2 : i32, i32, i32, i32
  }
  func.func @transform_1(%arg0: i32, %arg1: i32, %arg2: i32) -> (i32, i32, i32) {
    %c0_i32 = arith.constant 0 : i32
    return %arg1, %arg0, %arg2 : i32, i32, i32
  }
}

</mosaic_0001>

<llo_original>
// kernel: tpu_custom_call.1
$region0: #{tpu_custom_call.1}
  #allocation0 [shape = 'u32[]', space=smem, size = 0x4, offset = 0x4, fixed_abs, tag = 'smem constant byte address 0x4 - core index']
  #allocation1 [shape = 'u32[144,128]{1,0:T(1,128)}', space=vmem, size = 0x12000, scoped, tag = 'internal scratch']
  %s0 = inlined_call_operand.hbm [shape: f32[2,4,16,16], index: 0, kind: input, shape index: {}]
  %s1 = inlined_call_operand.hbm [shape: f32[2,16,16], index: 1, kind: output, shape index: {}]
  %s2 = sld [smem:[#allocation0]]
  $region41: #{tpu_custom_call.1} parent=0
    _
  %s4 = ssub.s32 1, %s2
  %s5 = scalar_select 0, %s4, %s2
  $region1: #{tpu_custom_call.1} parent=0
    #allocation2 [shape = 'u8[65536]{0}', space=vmem, size = 0x10000, scoped, tag = 'input window, operand 0']
    #allocation3 [shape = 's32[2]{0}', space=sflag, size = 0x8, scoped, tag = 'scoped memory for tpu_custom_call.1']
    #allocation4 [shape = 's32[2]{0}', space=sflag, size = 0x8, scoped, tag = 'scoped memory for tpu_custom_call.1']
    #allocation5 [shape = 'u8[16384]{0}', space=vmem, size = 0x4000, scoped, tag = 'output window, operand 0']
    %6 = vsyncpa [#allocation3], 0
    %s7 = scalar_lea.sflag [#allocation3], 1
    %8 = vsyncpa %s7, 0
    %9 = vsyncpa [#allocation4], 0
    %s10 = scalar_lea.sflag [#allocation4], 1
    %11 = vsyncpa %s10, 0
    loop: start=0, step=1, limit=4
    $region2: #{tpu_custom_call.1} parent=1 // loop_pre_header
      _
    $region3: #{tpu_custom_call.1} parent=1 // loop_header
      %s13 = sphi 0, %s17
      %p14 = scmp.ge.s32.totalorder %s13, 4
      %s20 = sphi 0, %s39
      %s21 = sphi 0, %s35
      %s22 = sphi 0, %s31
      %s23 = sphi 0, %s20
      %s24 = sphi 0, %s21
      %s25 = sphi 0, %s22
      %s26 = sphi 0, %s23
      %s27 = sphi 0, %s24
      %s28 = sphi 0, %s25
      %s46 = sphi 0, %s48
      %s49 = sphi 0, %s46
      %s50 = sphi 0, %s49
      %s66 = sphi 0, %s50
      %s76 = sphi 0, %s78
      %s79 = sphi 0, %s76
      %s80 = sphi 0, %s79
      %s96 = sphi 0, %s80
    $region4: #{tpu_custom_call.1} parent=1 // loop_header_branch
      %16 = sbr.rel (%p14) target = $region8
    $region5: #{tpu_custom_call.1} parent=1 // loop_body
      %s18 = ssub.s32 %s13, 1
      %s19 = ssub.s32 %s13, 2
      %s29 = sadd.s32 1, %s22
      %p30 = scmp.ge.s32.totalorder %s29, 1
      %s31 = scalar_select %p30, 0, %s29
      %s32 = sadd.s32 1, %s21
      %s33 = scalar_select %p30, %s32, %s21
      %p34 = scmp.ge.s32.totalorder %s33, 2
      %s35 = scalar_select %p34, 0, %s33
      %s36 = sadd.s32 1, %s20
      %s37 = scalar_select %p34, %s36, %s20
      %p38 = scmp.ge.s32.totalorder %s37, 1
      %s39 = scalar_select %p38, 0, %s37
      %s40 = ssub.s32 %s21, %s35
      %s41 = ssub.s32 %s20, %s39
      %s42 = sor.u32 %s40, %s41
      %s43 = ssub.s32 %s22, %s31
      %s44 = sor.u32 %s42, %s43
      %p45 = scmp.eq.s32.totalorder %s44, 0
      %s47 = sadd.s32 %s46, 1
      %s48 = scalar_select %p45, %s46, %s47
      %p51 = pneg %p45
      %p52 = scmp.eq.s32.totalorder %s13, 1
      %p53 = por %p51, %p52
      %p54 = scmp.ne.s32.totalorder %s46, %s49
      %p55 = scmp.eq.s32.totalorder %s13, 0
      %p56 = por %p54, %p55
      %p57 = scmp.ne.s32.totalorder %s46, %s49
      %p58 = scmp.eq.s32.totalorder %s18, 1
      %p59 = por %p57, %p58
      %p60 = scmp.ne.s32.totalorder %s49, %s50
      %p61 = scmp.eq.s32.totalorder %s18, 0
      %p62 = por %p60, %p61
      %p63 = scmp.ne.s32.totalorder %s49, %s50
      %p64 = scmp.eq.s32.totalorder %s19, 1
      %p65 = por %p63, %p64
      %p67 = scmp.ne.s32.totalorder %s50, %s66
      %p68 = scmp.eq.s32.totalorder %s19, 0
      %p69 = por %p67, %p68
      %s70 = ssub.s32 %s21, %s35
      %s71 = ssub.s32 %s20, %s39
      %s72 = sor.u32 %s70, %s71
      %s73 = ssub.s32 %s22, %s31
      %s74 = sor.u32 %s72, %s73
      %p75 = scmp.eq.s32.totalorder %s74, 0
      %s77 = sadd.s32 %s76, 1
      %s78 = scalar_select %p75, %s76, %s77
      %p81 = pneg %p75
      %p82 = scmp.eq.s32.totalorder %s13, 1
      %p83 = por %p81, %p82
      %p84 = scmp.ne.s32.totalorder %s76, %s79
      %p85 = scmp.eq.s32.totalorder %s13, 0
      %p86 = por %p84, %p85
      %p87 = scmp.ne.s32.totalorder %s76, %s79
      %p88 = scmp.eq.s32.totalorder %s18, 1
      %p89 = por %p87, %p88
      %p90 = scmp.ne.s32.totalorder %s79, %s80
      %p91 = scmp.eq.s32.totalorder %s18, 0
      %p92 = por %p90, %p91
      %p93 = scmp.ne.s32.totalorder %s79, %s80
      %p94 = scmp.eq.s32.totalorder %s19, 1
      %p95 = por %p93, %p94
      %p97 = scmp.ne.s32.totalorder %s80, %s96
      %p98 = scmp.eq.s32.totalorder %s19, 0
      %p99 = por %p97, %p98
      %p100 = scmp.le.s32.totalorder 1, %s13
      %p101 = scmp.lt.s32.totalorder %s13, 3
      %p102 = pnand %p100, %p101
      %p103 = pneg %p102
      // Predicated region
      $region9: #{tpu_custom_call.1} parent=5 // pred_check
        _
      $region10: #{tpu_custom_call.1} parent=5 // pred_check_branch
        %105 = sbr.rel (%p102) target = $region12
      $region11: #{tpu_custom_call.1} parent=5 // pred_region
        %s106 = ssub.s32 %s13, 1
      $region12: #{tpu_custom_call.1} parent=5 // pred_fallthru
        _
      %p107 = scmp.lt.s32.totalorder %s13, 2
      // Predicated region
      $region13: #{tpu_custom_call.1} parent=5 // pred_check
        %p108 = pneg %p107
      $region14: #{tpu_custom_call.1} parent=5 // pred_check_branch
        %110 = sbr.rel (%p108) target = $region16
      $region15: #{tpu_custom_call.1} parent=5 // pred_region
        // Predicated region
        $region17: #{tpu_custom_call.1} parent=15 // pred_check
          %p111 = pneg %p56
        $region18: #{tpu_custom_call.1} parent=15 // pred_check_branch
          %113 = sbr.rel (%p111) target = $region20
        $region19: #{tpu_custom_call.1} parent=15 // pred_region
          %s114 = sand.u32 %s46, 1
          %s115 = scalar_lea.sflag [#allocation3], %s114
          %s116 = sand.u32 %s46, 1
          %s117 = smul.addr %s116, 64
          %s118 = scalar_lea.vmem [#allocation2], %s117
          %s119 = smul.u32 2, %s20
          %s121 = ssub.s32 1024, 1024
          %122 = vsyncadd %s115, %s121
          %s123 = sadd.s32 %s22, %s119
          %s124 = smul.addr %s21, 8
          %s125 = sadd.s32 %s123, %s124
          %s126 = smul.addr %s125, 128
          %s127 = scalar_lea.hbm %s0, %s126
          %s128 = sshll.u32 %s118, 4
          %s129 = int_to_ptr.vmem [resolvable:$true] %s128
          %134 = dma.hbm_to_vmem [thread:$0]  %s127, 1024, %s129, %s115, 128, 128, 8
        $region20: #{tpu_custom_call.1} parent=15 // pred_fallthru
          _
      $region16: #{tpu_custom_call.1} parent=5 // pred_fallthru
        _
      %p135 = scmp.le.s32.totalorder 1, %s13
      %p136 = scmp.lt.s32.totalorder %s13, 3
      %p137 = pnand %p135, %p136
      %p138 = pneg %p137
      // Predicated region
      $region21: #{tpu_custom_call.1} parent=5 // pred_check
        _
      $region22: #{tpu_custom_call.1} parent=5 // pred_check_branch
        %140 = sbr.rel (%p137) target = $region24
      $region23: #{tpu_custom_call.1} parent=5 // pred_region
        %s141 = ssub.s32 %s13, 1
        %s142 = sand.u32 %s49, 1
        %s143 = scalar_lea.sflag [#allocation3], %s142
        %s144 = sand.u32 %s49, 1
        %s145 = smul.addr %s144, 64
        %s146 = scalar_lea.vmem [#allocation2], %s145
        // Predicated region
        $region25: #{tpu_custom_call.1} parent=23 // pred_check
          %p147 = pneg %p62
        $region26: #{tpu_custom_call.1} parent=23 // pred_check_branch
          %149 = sbr.rel (%p147) target = $region28
        $region27: #{tpu_custom_call.1} parent=23 // pred_region
          %150 = dma.done %s143, 1024
        $region28: #{tpu_custom_call.1} parent=23 // pred_fallthru
          _
        %s151 = sand.u32 %s49, 1
        %s152 = scalar_lea.sflag [#allocation3], %s151
        %s153 = sand.u32 %s49, 1
        %s154 = smul.addr %s153, 64
        %s155 = scalar_lea.vmem [#allocation2], %s154
        %p156 = pneg %p62
        %p157 = pneg %p59
        %p158 = pneg %p92
        %p159 = pneg %p89
        %s160 = sand.u32 %s79, 1
        %s161 = scalar_lea.sflag [#allocation4], %s160
        %s162 = sand.u32 %s79, 1
        %s163 = smul.addr %s162, 16
        %s164 = scalar_lea.vmem [#allocation5], %s163
        %s165 = smul.u32 2, %s23
        %s166 = smul.u32 2, %s23
        %v167 = vld [vmem:[%s146] sm:$0xff]
        %v168 = vld [vmem:[%s146 + $0x8] sm:$0xff]
        %v169 = vmul.f32 %v167, 0.0
        %v170 = vmul.f32 %v168, 0.0
        %v171 = vadd.f32 %v169, 0.0
        %v172 = vadd.f32 %v170, 0.0
        %s173 = scalar_lea.vmem %s146, 16 [#allocation2]
        %v174 = vld [vmem:[%s173] sm:$0xff]
        %v175 = vld [vmem:[%s173 + $0x8] sm:$0xff]
        %v176 = vadd.f32 %v171, %v174
        %v177 = vadd.f32 %v172, %v175
        %s178 = scalar_lea.vmem %s146, 32 [#allocation2]
        %v179 = vld [vmem:[%s178] sm:$0xff]
        %v180 = vld [vmem:[%s178 + $0x8] sm:$0xff]
        %v181 = vmul.f32 %v179, 2.0
        %v182 = vmul.f32 %v180, 2.0
        %v183 = vadd.f32 %v176, %v181
        %v184 = vadd.f32 %v177, %v182
        %s185 = scalar_lea.vmem %s146, 48 [#allocation2]
        %v186 = vld [vmem:[%s185] sm:$0xff]
        %v187 = vld [vmem:[%s185 + $0x8] sm:$0xff]
        %v188 = vmul.f32 %v186, 3.0
        %v189 = vmul.f32 %v187, 3.0
        %v190 = vadd.f32 %v183, %v188
        %v191 = vadd.f32 %v184, %v189
        %vm192 = vcmask 130048
        %193 = vst.msk [vmem:[%s164] sm:$0xff] %vm192, %v190
        %194 = vst.msk [vmem:[%s164 + $0x8] sm:$0xff] %vm192, %v191
        %s195 = sand.u32 %s79, 1
        %s196 = scalar_lea.sflag [#allocation4], %s195
        %s197 = sand.u32 %s79, 1
        %s198 = smul.addr %s197, 16
        %s199 = scalar_lea.vmem [#allocation5], %s198
        // Predicated region
        $region29: #{tpu_custom_call.1} parent=23 // pred_check
          %p200 = pneg %p89
        $region30: #{tpu_custom_call.1} parent=23 // pred_check_branch
          %202 = sbr.rel (%p200) target = $region32
        $region31: #{tpu_custom_call.1} parent=23 // pred_region
          %s203 = smul.u32 2, %s23
          %s205 = ssub.s32 256, 256
          %206 = vsyncadd %s196, %s205
          %s207 = sadd.s32 %s25, %s203
          %s208 = smul.addr %s24, 2
          %s209 = sadd.s32 %s207, %s208
          %s210 = smul.addr %s209, 128
          %s211 = scalar_lea.hbm %s1, %s210
          %s212 = sshll.u32 %s199, 4
          %s213 = int_to_ptr.vmem [resolvable:$true] %s212
          %218 = dma.vmem_to_hbm [thread:$0]  %s213, 256, %s211, %s196, 128, 128, 8
        $region32: #{tpu_custom_call.1} parent=23 // pred_fallthru
          _
      $region24: #{tpu_custom_call.1} parent=5 // pred_fallthru
        _
      %p219 = scmp.le.s32.totalorder 2, %s13
      // Predicated region
      $region33: #{tpu_custom_call.1} parent=5 // pred_check
        %p220 = pneg %p219
      $region34: #{tpu_custom_call.1} parent=5 // pred_check_branch
        %222 = sbr.rel (%p220) target = $region36
      $region35: #{tpu_custom_call.1} parent=5 // pred_region
        %s223 = ssub.s32 %s13, 2
        // Predicated region
        $region37: #{tpu_custom_call.1} parent=35 // pred_check
          %p224 = pneg %p95
        $region38: #{tpu_custom_call.1} parent=35 // pred_check_branch
          %226 = sbr.rel (%p224) target = $region40
        $region39: #{tpu_custom_call.1} parent=35 // pred_region
          %s227 = sand.u32 %s80, 1
          %s228 = scalar_lea.sflag [#allocation4], %s227
          %s229 = sand.u32 %s80, 1
          %s230 = smul.addr %s229, 16
          %s231 = scalar_lea.vmem [#allocation5], %s230
          %232 = dma.done %s228, 256
        $region40: #{tpu_custom_call.1} parent=35 // pred_fallthru
          _
      $region36: #{tpu_custom_call.1} parent=5 // pred_fallthru
        _
    $region6: #{tpu_custom_call.1} parent=1 // loop_footer
      %s17 = sadd.s32 1, %s13
    $region7: #{tpu_custom_call.1} parent=1 // loop_footer_branch
      %12 = sbr.rel target = $region3
    $region8: #{tpu_custom_call.1} parent=1 // loop_exit
      _
    %233 = vsyncpa [#allocation3], 1
    %s234 = scalar_lea.sflag [#allocation3], 1
    %235 = vsyncpa %s234, 1
    %236 = vsyncpa [#allocation4], 1
    %s237 = scalar_lea.sflag [#allocation4], 1
    %238 = vsyncpa %s237, 1

</llo_original>
